<compile_context>
chip_gen: v7x
topology: tpu7x:2x2x1
jax: 0.10.0
libtpu: 0.0.40
codegen_flags: <defaults>
</compile_context>

<pallas_src>
import functools

import jax
import jax.numpy as jnp
from jax.experimental import pallas as pl
from jax.experimental.pallas import tpu as pltpu

_LANE = 128
_SUBLANE = 8


def _round_up(n, m):
    return ((n + m - 1) // m) * m


def _pad2(a, rows, cols):
    return jnp.pad(a, ((0, rows - a.shape[0]), (0, cols - a.shape[1])))


def _make_decoder_kernel(num_layers, E_p, Hp, Op, Kin):
    """One grid step == one GRU layer.

    Ref order: x, h0, Wemb, Wlayers, blayers, Wout, b_eo, seq_out, hid_out, xh_scratch.
    Gate column layout of Wlayers / blayers: [ r | z | x_n | h_n ] (PyTorch r,z,n order,
    with the n-gate's x and h contributions kept in separate column blocks).
    """
    Kp = Kin + Hp

    def kernel(x_ref, h0_ref, Wemb_ref, Wl_ref, bl_ref, Wout_ref, beo_ref,
               seq_ref, hid_ref, xh_ref):
        l = pl.program_id(0)

        # Layer 0 only: embedding Linear -> bf16 scratch lanes [0, Kin).
        @pl.when(l == 0)
        def _():
            emb = jnp.dot(x_ref[...], Wemb_ref[...],
                          preferred_element_type=jnp.float32)
            xh_ref[:, :E_p] = (emb + beo_ref[0:1, :E_p]).astype(jnp.bfloat16)
            if Kin > E_p:  # static
                xh_ref[:, E_p:Kin] = jnp.zeros(
                    (xh_ref.shape[0], Kin - E_p), jnp.bfloat16)

        h = h0_ref[0]                                # (Bp, Hp) f32
        xh_ref[:, Kin:] = h.astype(jnp.bfloat16)     # lanes [Kin, Kin+Hp)

        # One fused MXU matmul per layer: (Bp, Kin+Hp) @ (Kin+Hp, 4*Hp), f32 accumulate.
        gates = jnp.dot(xh_ref[...], Wl_ref[0],
                        preferred_element_type=jnp.float32) + bl_ref[0]

        rz = jax.nn.sigmoid(gates[:, :2 * Hp])       # fused r|z sigmoid
        r = rz[:, :Hp]
        z = rz[:, Hp:2 * Hp]
        n = jnp.tanh(gates[:, 2 * Hp:3 * Hp] + r * gates[:, 3 * Hp:4 * Hp])
        h_new = n + z * (h - n)                      # == (1-z)*n + z*h

        hid_ref[0] = h_new
        # Stash next layer's input (bf16) into the scratch slab.
        xh_ref[:, :Hp] = h_new.astype(jnp.bfloat16)
        if Kin > Hp:  # static
            xh_ref[:, Hp:Kin] = jnp.zeros(
                (xh_ref.shape[0], Kin - Hp), jnp.bfloat16)

        # Last layer only: output Linear.
        @pl.when(l == num_layers - 1)
        def _():
            seq_ref[...] = (
                jnp.dot(h_new.astype(jnp.bfloat16), Wout_ref[...],
                        preferred_element_type=jnp.float32)
                + beo_ref[1:2, :Op])

    return kernel


@functools.partial(jax.jit, static_argnames=("num_layers", "output_dim"))
def decoder_forward(decode_input, incode_hidden, packed, *, num_layers, output_dim):
    B, in_dim = decode_input.shape
    L, _, H = incode_hidden.shape
    assert L == num_layers

    Wemb, Wout = packed["Wemb"], packed["Wout"]
    Wlayers, blayers, b_eo = packed["Wlayers"], packed["blayers"], packed["b_eo"]
    In_p, E_p = Wemb.shape
    Hp, Op = Wout.shape
    _, Kp, four_Hp = Wlayers.shape
    Kin = Kp - Hp
    Bp = _round_up(B, _SUBLANE)

    # Host-side zero padding to lane/sublane multiples; x already bf16 for the MXU.
    x_pad = jnp.pad(decode_input,
                    ((0, Bp - B), (0, In_p - in_dim))).astype(jnp.bfloat16)
    h0_pad = jnp.pad(incode_hidden, ((0, 0), (0, Bp - B), (0, Hp - H)))

    # VMEM budget guard (per-layer blocking keeps only ~2 layer slabs resident).
    resident = (Wemb.size * 2 + Wout.size * 2 + b_eo.size * 4 + x_pad.size * 2
                + 2 * Kp * four_Hp * 2 + 2 * four_Hp * 4
                + 4 * Bp * Hp * 4 + Bp * Op * 4 + Bp * Kp * 2)
    vmem_limit = int(min(max(2 * resident + (4 << 20), 32 << 20), 64 << 20))

    kernel = _make_decoder_kernel(num_layers, E_p, Hp, Op, Kin)

    seq_pad, hid_pad = pl.pallas_call(
        kernel,
        grid=(num_layers,),
        in_specs=[
            pl.BlockSpec((Bp, In_p), lambda l: (0, 0)),            # x (bf16)
            pl.BlockSpec((1, Bp, Hp), lambda l: (l, 0, 0)),        # h0 (f32)
            pl.BlockSpec((In_p, E_p), lambda l: (0, 0)),           # Wemb (bf16)
            pl.BlockSpec((1, Kp, four_Hp), lambda l: (l, 0, 0)),   # layer weight slab (bf16)
            pl.BlockSpec((1, 1, four_Hp), lambda l: (l, 0, 0)),    # layer bias slab (f32)
            pl.BlockSpec((Hp, Op), lambda l: (0, 0)),              # Wout (bf16)
            pl.BlockSpec(b_eo.shape, lambda l: (0, 0)),            # [bemb; bout] (f32)
        ],
        out_specs=(
            pl.BlockSpec((Bp, Op), lambda l: (0, 0)),
            pl.BlockSpec((1, Bp, Hp), lambda l: (l, 0, 0)),
        ),
        out_shape=(
            jax.ShapeDtypeStruct((Bp, Op), jnp.float32),
            jax.ShapeDtypeStruct((num_layers, Bp, Hp), jnp.float32),
        ),
        scratch_shapes=[pltpu.VMEM((Bp, Kp), jnp.bfloat16)],       # layer-input carry
        input_output_aliases={1: 1},   # reuse incode_hidden buffer for last_hidden
        compiler_params=pltpu.CompilerParams(
            dimension_semantics=("arbitrary",),   # layers are sequentially dependent
            vmem_limit_bytes=vmem_limit,
        ),
    )(x_pad, h0_pad, Wemb, Wlayers, blayers, Wout, b_eo)

    return seq_pad[:B, :output_dim], hid_pad[:, :B, :H]


def init_params(key, input_dim, latent_dim, output_dim, embed_dim, num_layers):
    """Deterministic synthetic per-gate parameters (shapes mirror the PyTorch module,
    pre-transposed to (in, out) and gate-stacked (3, in, H) in PyTorch's (r,z,n) order)."""
    keys = jax.random.split(key, 4 + 4 * num_layers)
    p = {}
    p["Wemb"] = jax.random.normal(keys[0], (input_dim, embed_dim), jnp.float32) * 0.1
    p["bemb"] = jax.random.normal(keys[1], (1, embed_dim), jnp.float32) * 0.1
    for l in range(num_layers):
        in_l = embed_dim if l == 0 else latent_dim
        k = keys[2 + 4 * l: 2 + 4 * (l + 1)]
        p[f"Wih_{l}"] = jax.random.normal(k[0], (3, in_l, latent_dim), jnp.float32) * 0.1
        p[f"bih_{l}"] = jax.random.normal(k[1], (3, 1, latent_dim), jnp.float32) * 0.1
        p[f"Whh_{l}"] = jax.random.normal(k[2], (3, latent_dim, latent_dim), jnp.float32) * 0.1
        p[f"bhh_{l}"] = jax.random.normal(k[3], (3, 1, latent_dim), jnp.float32) * 0.1
    p["Wout"] = jax.random.normal(keys[-2], (latent_dim, output_dim), jnp.float32) * 0.1
    p["bout"] = jax.random.normal(keys[-1], (1, output_dim), jnp.float32) * 0.1
    return p


def pack_params(p, num_layers):
    """Coalesce everything into a few lane-dense slabs.

    Per layer l, weight block W_l of shape (Kin+Hp, 4*Hp), bf16, columns [r|z|x_n|h_n]:
        rows [0:in_l]      = Wih_{r,z,n}  (the h_n column block is zero here)
        rows [Kin:Kin+H]   = Whh_{r,z}, and Whh_n only in the h_n column block
    Bias block (1, 4*Hp): [bih_r+bhh_r | bih_z+bhh_z | bih_n | bhh_n].
    """
    In, E = p["Wemb"].shape
    H = p["Whh_0"].shape[1]
    O = p["Wout"].shape[1]
    In_p = _round_up(In, _LANE)
    E_p = _round_up(E, _LANE)
    Hp = _round_up(H, _LANE)
    Op = _round_up(O, _LANE)
    Kin = max(E_p, Hp)
    Kp = Kin + Hp
    Wb = max(E_p, Op)

    packed = {}
    packed["Wemb"] = _pad2(p["Wemb"], In_p, E_p).astype(jnp.bfloat16)
    packed["Wout"] = _pad2(p["Wout"], Hp, Op).astype(jnp.bfloat16)

    b_eo = jnp.zeros((2, Wb), jnp.float32)
    b_eo = b_eo.at[0, :E].set(p["bemb"][0])
    b_eo = b_eo.at[1, :O].set(p["bout"][0])
    packed["b_eo"] = b_eo

    w_layers, b_layers = [], []
    for l in range(num_layers):
        in_l = E if l == 0 else H
        Wih, Whh = p[f"Wih_{l}"], p[f"Whh_{l}"]
        bih, bhh = p[f"bih_{l}"], p[f"bhh_{l}"]

        Wl = jnp.zeros((Kp, 4 * Hp), jnp.float32)
        Wl = Wl.at[:in_l, 0:H].set(Wih[0])                    # r, x-side
        Wl = Wl.at[Kin:Kin + H, 0:H].set(Whh[0])              # r, h-side
        Wl = Wl.at[:in_l, Hp:Hp + H].set(Wih[1])              # z, x-side
        Wl = Wl.at[Kin:Kin + H, Hp:Hp + H].set(Whh[1])        # z, h-side
        Wl = Wl.at[:in_l, 2 * Hp:2 * Hp + H].set(Wih[2])      # n, x-side only
        Wl = Wl.at[Kin:Kin + H, 3 * Hp:3 * Hp + H].set(Whh[2])  # n, h-side only
        w_layers.append(Wl.astype(jnp.bfloat16))

        bl = jnp.zeros((1, 4 * Hp), jnp.float32)
        bl = bl.at[0, 0:H].set((bih[0] + bhh[0])[0])
        bl = bl.at[0, Hp:Hp + H].set((bih[1] + bhh[1])[0])
        bl = bl.at[0, 2 * Hp:2 * Hp + H].set(bih[2][0])
        bl = bl.at[0, 3 * Hp:3 * Hp + H].set(bhh[2][0])
        b_layers.append(bl)

    packed["Wlayers"] = jnp.stack(w_layers, axis=0)   # (L, Kp, 4*Hp) bf16
    packed["blayers"] = jnp.stack(b_layers, axis=0)   # (L, 1, 4*Hp)  f32
    return packed


def decoder_reference(decode_input, incode_hidden, params, num_layers,
                      matmul_dtype=jnp.float32):
    """Pure-JAX reference matching PyTorch nn.GRU single-step semantics.
    With matmul_dtype=bf16 it mirrors the kernel's MXU precision."""

    def mm(a, w):
        return jnp.dot(a.astype(matmul_dtype), w.astype(matmul_dtype),
                       preferred_element_type=jnp.float32)

    x = mm(decode_input, params["Wemb"]) + params["bemb"]
    new_hidden = []
    for l in range(num_layers):
        h = incode_hidden[l]
        Wih, bih = params[f"Wih_{l}"], params[f"bih_{l}"]
        Whh, bhh = params[f"Whh_{l}"], params[f"bhh_{l}"]
        xr, xz, xn = (mm(x, Wih[g]) + bih[g] for g in range(3))
        hr, hz, hn = (mm(h, Whh[g]) + bhh[g] for g in range(3))
        r = jax.nn.sigmoid(xr + hr)
        z = jax.nn.sigmoid(xz + hz)
        n = jnp.tanh(xn + r * hn)
        h = (1.0 - z) * n + z * h
        new_hidden.append(h)
        x = h
    seq_gen = mm(x, params["Wout"]) + params["bout"]
    return seq_gen, jnp.stack(new_hidden, axis=0)


if __name__ == "__main__":
    # Small shapes consistent with the module's forward pass.
    B = 4
    input_dim = 16
    embed_dim = 32
    latent_dim = 32
    output_dim = 16
    num_layers = 2

    key = jax.random.PRNGKey(0)
    k_x, k_h, k_p = jax.random.split(key, 3)

    decode_input = jax.random.normal(k_x, (B, input_dim), jnp.float32)
    incode_hidden = jax.random.normal(k_h, (num_layers, B, latent_dim), jnp.float32)
    params = init_params(k_p, input_dim, latent_dim, output_dim, embed_dim, num_layers)
    packed = pack_params(params, num_layers)

    seq_gen, last_hidden = decoder_forward(
        decode_input, incode_hidden, packed,
        num_layers=num_layers, output_dim=output_dim,
    )
    jax.block_until_ready((seq_gen, last_hidden))

    assert seq_gen.shape == (B, output_dim)
    assert last_hidden.shape == (num_layers, B, latent_dim)

    # Precision-matched reference (bf16 matmul operands, f32 accumulation).
    ref_seq_bf16, ref_hid_bf16 = decoder_reference(
        decode_input, incode_hidden, params, num_layers, matmul_dtype=jnp.bfloat16)
    assert jnp.allclose(seq_gen, ref_seq_bf16, atol=1e-4, rtol=1e-4)
    assert jnp.allclose(last_hidden, ref_hid_bf16, atol=1e-4, rtol=1e-4)

    # Loose check against full-f32 PyTorch-equivalent semantics (bf16 weight rounding only).
    ref_seq_f32, ref_hid_f32 = decoder_reference(
        decode_input, incode_hidden, params, num_layers, matmul_dtype=jnp.float32)
    assert jnp.allclose(seq_gen, ref_seq_f32, atol=1e-1, rtol=1e-1)
    assert jnp.allclose(last_hidden, ref_hid_f32, atol=1e-1, rtol=1e-1)

    print("KERNEL_OK")
</pallas_src>

<mosaic_0001>
module attributes {stable_mosaic.version = 11 : i64} {
  func.func @kernel(%arg0: i32, %arg1: memref<8x128xbf16, #tpu.memory_space<vmem>>, %arg2: memref<1x8x128xf32, #tpu.memory_space<vmem>>, %arg3: memref<128x128xbf16, #tpu.memory_space<vmem>>, %arg4: memref<1x256x512xbf16, #tpu.memory_space<vmem>>, %arg5: memref<1x1x512xf32, #tpu.memory_space<vmem>>, %arg6: memref<128x128xbf16, #tpu.memory_space<vmem>>, %arg7: memref<2x128xf32, #tpu.memory_space<vmem>>, %arg8: memref<8x128xf32, #tpu.memory_space<vmem>>, %arg9: memref<1x8x128xf32, #tpu.memory_space<vmem>>, %arg10: memref<8x256xbf16, #tpu.memory_space<vmem>>) attributes {dimension_semantics = [#tpu.dimension_semantics<arbitrary>], iteration_bounds = array<i64: 2>, scalar_prefetch = 0 : i64, scratch_operands = 1 : i64, tpu.core_type = #tpu.core_type<tc>, window_params = [{pipeline_mode = #tpu.pipeline_mode<synchronous>, transform_indices = @transform_0, window_bounds = array<i64: 8, 128>}, {transform_indices = @transform_1, window_bounds = array<i64: 1, 8, 128>}, {pipeline_mode = #tpu.pipeline_mode<synchronous>, transform_indices = @transform_2, window_bounds = array<i64: 128, 128>}, {transform_indices = @transform_3, window_bounds = array<i64: 1, 256, 512>}, {transform_indices = @transform_4, window_bounds = array<i64: 1, 1, 512>}, {pipeline_mode = #tpu.pipeline_mode<synchronous>, transform_indices = @transform_5, window_bounds = array<i64: 128, 128>}, {pipeline_mode = #tpu.pipeline_mode<synchronous>, transform_indices = @transform_6, window_bounds = array<i64: 2, 128>}, {pipeline_mode = #tpu.pipeline_mode<synchronous>, transform_indices = @transform_7, window_bounds = array<i64: 8, 128>}, {transform_indices = @transform_8, window_bounds = array<i64: 1, 8, 128>}]} {
    %c0_i32 = arith.constant 0 : i32
    %0 = arith.cmpi eq, %arg0, %c0_i32 : i32
    %1 = arith.extui %0 : i1 to i32
    %c0_i32_0 = arith.constant 0 : i32
    %2 = arith.cmpi ne, %1, %c0_i32_0 : i32
    scf.if %2 {
      %c0_19 = arith.constant 0 : index
      %c0_20 = arith.constant 0 : index
      %39 = vector.load %arg1[%c0_19, %c0_20] : memref<8x128xbf16, #tpu.memory_space<vmem>>, vector<8x128xbf16>
      %c0_21 = arith.constant 0 : index
      %c0_22 = arith.constant 0 : index
      %40 = vector.load %arg3[%c0_21, %c0_22] : memref<128x128xbf16, #tpu.memory_space<vmem>>, vector<128x128xbf16>
      %cst_23 = arith.constant dense<0.000000e+00> : vector<8x128xf32>
      %41 = tpu.matmul %39, %40, %cst_23 {dimension_numbers = #tpu.dot_dimension_numbers<[1], [0], [0], [1], [0, 0, 1, 1], [], []>} : vector<8x128xbf16>, vector<128x128xbf16>, vector<8x128xf32> -> vector<8x128xf32>
      %c0_24 = arith.constant 0 : index
      %c0_25 = arith.constant 0 : index
      %42 = vector.load %arg7[%c0_24, %c0_25] : memref<2x128xf32, #tpu.memory_space<vmem>>, vector<1x128xf32>
      %43 = vector.broadcast %42 : vector<1x128xf32> to vector<8x128xf32>
      %44 = arith.addf %41, %43 : vector<8x128xf32>
      %45 = arith.truncf %44 : vector<8x128xf32> to vector<8x128xbf16>
      %c0_26 = arith.constant 0 : index
      %c0_27 = arith.constant 0 : index
      %46 = vector.load %arg10[%c0_26, %c0_27] : memref<8x256xbf16, #tpu.memory_space<vmem>>, vector<8x128xbf16>
      tpu.vector_store %arg10[%c0_26, %c0_27], %45 {strides = array<i32>} : memref<8x256xbf16, #tpu.memory_space<vmem>>, vector<8x128xbf16>,
    } else {
    }
    %c0 = arith.constant 0 : index
    %c0_1 = arith.constant 0 : index
    %c0_2 = arith.constant 0 : index
    %3 = vector.load %arg2[%c0, %c0_1, %c0_2] : memref<1x8x128xf32, #tpu.memory_space<vmem>>, vector<1x8x128xf32>
    %4 = vector.shape_cast %3 : vector<1x8x128xf32> to vector<8x128xf32>
    %5 = arith.truncf %4 : vector<8x128xf32> to vector<8x128xbf16>
    %c0_3 = arith.constant 0 : index
    %c128 = arith.constant 128 : index
    %6 = vector.load %arg10[%c0_3, %c128] : memref<8x256xbf16, #tpu.memory_space<vmem>>, vector<8x128xbf16>
    tpu.vector_store %arg10[%c0_3, %c128], %5 {strides = array<i32>} : memref<8x256xbf16, #tpu.memory_space<vmem>>, vector<8x128xbf16>,
    %c0_4 = arith.constant 0 : index
    %c0_5 = arith.constant 0 : index
    %7 = vector.load %arg10[%c0_4, %c0_5] : memref<8x256xbf16, #tpu.memory_space<vmem>>, vector<8x256xbf16>
    %c0_6 = arith.constant 0 : index
    %c0_7 = arith.constant 0 : index
    %c0_8 = arith.constant 0 : index
    %8 = vector.load %arg4[%c0_6, %c0_7, %c0_8] : memref<1x256x512xbf16, #tpu.memory_space<vmem>>, vector<1x256x512xbf16>
    %9 = vector.shape_cast %8 : vector<1x256x512xbf16> to vector<256x512xbf16>
    %cst = arith.constant dense<0.000000e+00> : vector<8x512xf32>
    %10 = tpu.matmul %7, %9, %cst {dimension_numbers = #tpu.dot_dimension_numbers<[1], [0], [0], [1], [0, 0, 1, 1], [], []>} : vector<8x256xbf16>, vector<256x512xbf16>, vector<8x512xf32> -> vector<8x512xf32>
    %c0_9 = arith.constant 0 : index
    %c0_10 = arith.constant 0 : index
    %c0_11 = arith.constant 0 : index
    %11 = vector.load %arg5[%c0_9, %c0_10, %c0_11] : memref<1x1x512xf32, #tpu.memory_space<vmem>>, vector<1x1x512xf32>
    %12 = vector.shape_cast %11 : vector<1x1x512xf32> to vector<1x512xf32>
    %13 = vector.broadcast %12 : vector<1x512xf32> to vector<8x512xf32>
    %14 = arith.addf %10, %13 : vector<8x512xf32>
    %15 = vector.extract_strided_slice %14 {offsets = [0, 0], sizes = [8, 256], strides = [1, 1]} : vector<8x512xf32> to vector<8x256xf32>
    %16 = arith.negf %15 : vector<8x256xf32>
    %17 = math.exp %16 : vector<8x256xf32>
    %cst_12 = arith.constant 1.000000e+00 : f32
    %18 = vector.broadcast %cst_12 : f32 to vector<8x256xf32>
    %19 = arith.addf %18, %17 : vector<8x256xf32>
    %20 = arith.divf %18, %19 : vector<8x256xf32>
    %21 = vector.extract_strided_slice %20 {offsets = [0, 0], sizes = [8, 128], strides = [1, 1]} : vector<8x256xf32> to vector<8x128xf32>
    %22 = vector.extract_strided_slice %20 {offsets = [0, 128], sizes = [8, 128], strides = [1, 1]} : vector<8x256xf32> to vector<8x128xf32>
    %23 = vector.extract_strided_slice %14 {offsets = [0, 256], sizes = [8, 128], strides = [1, 1]} : vector<8x512xf32> to vector<8x128xf32>
    %24 = vector.extract_strided_slice %14 {offsets = [0, 384], sizes = [8, 128], strides = [1, 1]} : vector<8x512xf32> to vector<8x128xf32>
    %25 = arith.mulf %21, %24 : vector<8x128xf32>
    %26 = arith.addf %23, %25 : vector<8x128xf32>
    %27 = math.tanh %26 : vector<8x128xf32>
    %28 = arith.subf %4, %27 : vector<8x128xf32>
    %29 = arith.mulf %22, %28 : vector<8x128xf32>
    %30 = arith.addf %27, %29 : vector<8x128xf32>
    %c0_13 = arith.constant 0 : index
    %c0_14 = arith.constant 0 : index
    %c0_15 = arith.constant 0 : index
    %31 = vector.load %arg9[%c0_13, %c0_14, %c0_15] : memref<1x8x128xf32, #tpu.memory_space<vmem>>, vector<1x8x128xf32>
    %32 = vector.shape_cast %31 : vector<1x8x128xf32> to vector<8x128xf32>
    %33 = vector.shape_cast %30 : vector<8x128xf32> to vector<1x8x128xf32>
    tpu.vector_store %arg9[%c0_13, %c0_14, %c0_15], %33 {strides = array<i32>} : memref<1x8x128xf32, #tpu.memory_space<vmem>>, vector<1x8x128xf32>,
    %34 = arith.truncf %30 : vector<8x128xf32> to vector<8x128xbf16>
    %c0_16 = arith.constant 0 : index
    %c0_17 = arith.constant 0 : index
    %35 = vector.load %arg10[%c0_16, %c0_17] : memref<8x256xbf16, #tpu.memory_space<vmem>>, vector<8x128xbf16>
    tpu.vector_store %arg10[%c0_16, %c0_17], %34 {strides = array<i32>} : memref<8x256xbf16, #tpu.memory_space<vmem>>, vector<8x128xbf16>,
    %c1_i32 = arith.constant 1 : i32
    %36 = arith.cmpi eq, %arg0, %c1_i32 : i32
    %37 = arith.extui %36 : i1 to i32
    %c0_i32_18 = arith.constant 0 : i32
    %38 = arith.cmpi ne, %37, %c0_i32_18 : i32
    scf.if %38 {
      %39 = arith.truncf %30 : vector<8x128xf32> to vector<8x128xbf16>
      %c0_19 = arith.constant 0 : index
      %c0_20 = arith.constant 0 : index
      %40 = vector.load %arg6[%c0_19, %c0_20] : memref<128x128xbf16, #tpu.memory_space<vmem>>, vector<128x128xbf16>
      %cst_21 = arith.constant dense<0.000000e+00> : vector<8x128xf32>
      %41 = tpu.matmul %39, %40, %cst_21 {dimension_numbers = #tpu.dot_dimension_numbers<[1], [0], [0], [1], [0, 0, 1, 1], [], []>} : vector<8x128xbf16>, vector<128x128xbf16>, vector<8x128xf32> -> vector<8x128xf32>
      %c1 = arith.constant 1 : index
      %c0_22 = arith.constant 0 : index
      %42 = vector.load %arg7[%c1, %c0_22] : memref<2x128xf32, #tpu.memory_space<vmem>>, vector<1x128xf32>
      %43 = vector.broadcast %42 : vector<1x128xf32> to vector<8x128xf32>
      %44 = arith.addf %41, %43 : vector<8x128xf32>
      %c0_23 = arith.constant 0 : index
      %c0_24 = arith.constant 0 : index
      %45 = vector.load %arg8[%c0_23, %c0_24] : memref<8x128xf32, #tpu.memory_space<vmem>>, vector<8x128xf32>
      tpu.vector_store %arg8[%c0_23, %c0_24], %44 {strides = array<i32>} : memref<8x128xf32, #tpu.memory_space<vmem>>, vector<8x128xf32>,
    } else {
    }
    return
  }
  func.func @transform_0(%arg0: i32) -> (i32, i32) {
    %c0_i32 = arith.constant 0 : i32
    %c0_i32_0 = arith.constant 0 : i32
    %c0_i32_1 = arith.constant 0 : i32
    return %c0_i32, %c0_i32_0 : i32, i32
  }
  func.func @transform_1(%arg0: i32) -> (i32, i32, i32) {
    %c0_i32 = arith.constant 0 : i32
    %c0_i32_0 = arith.constant 0 : i32
    %c0_i32_1 = arith.constant 0 : i32
    return %arg0, %c0_i32, %c0_i32_0 : i32, i32, i32
  }
  func.func @transform_2(%arg0: i32) -> (i32, i32) {
    %c0_i32 = arith.constant 0 : i32
    %c0_i32_0 = arith.constant 0 : i32
    %c0_i32_1 = arith.constant 0 : i32
    return %c0_i32, %c0_i32_0 : i32, i32
  }
  func.func @transform_3(%arg0: i32) -> (i32, i32, i32) {
    %c0_i32 = arith.constant 0 : i32
    %c0_i32_0 = arith.constant 0 : i32
    %c0_i32_1 = arith.constant 0 : i32
    return %arg0, %c0_i32, %c0_i32_0 : i32, i32, i32
  }
  func.func @transform_4(%arg0: i32) -> (i32, i32, i32) {
    %c0_i32 = arith.constant 0 : i32
    %c0_i32_0 = arith.constant 0 : i32
    %c0_i32_1 = arith.constant 0 : i32
    return %arg0, %c0_i32, %c0_i32_0 : i32, i32, i32
  }
  func.func @transform_5(%arg0: i32) -> (i32, i32) {
    %c0_i32 = arith.constant 0 : i32
    %c0_i32_0 = arith.constant 0 : i32
    %c0_i32_1 = arith.constant 0 : i32
    return %c0_i32, %c0_i32_0 : i32, i32
  }
  func.func @transform_6(%arg0: i32) -> (i32, i32) {
    %c0_i32 = arith.constant 0 : i32
    %c0_i32_0 = arith.constant 0 : i32
    %c0_i32_1 = arith.constant 0 : i32
    return %c0_i32, %c0_i32_0 : i32, i32
  }
  func.func @transform_7(%arg0: i32) -> (i32, i32) {
    %c0_i32 = arith.constant 0 : i32
    %c0_i32_0 = arith.constant 0 : i32
    %c0_i32_1 = arith.constant 0 : i32
    return %c0_i32, %c0_i32_0 : i32, i32
  }
  func.func @transform_8(%arg0: i32) -> (i32, i32, i32) {
    %c0_i32 = arith.constant 0 : i32
    %c0_i32_0 = arith.constant 0 : i32
    %c0_i32_1 = arith.constant 0 : i32
    return %arg0, %c0_i32, %c0_i32_0 : i32, i32, i32
  }
}

</mosaic_0001>

<llo_original>
// kernel: decoder_forward.1
$region0: #{decoder_forward.1}
  #allocation0 [shape = 'u32[]', space=smem, size = 0x4, offset = 0x4, fixed_abs, tag = 'smem constant byte address 0x4 - core index']
  #allocation1 [shape = 'u32[144,128]{1,0:T(1,128)}', space=vmem, size = 0x12000, scoped, tag = 'internal scratch']
  #allocation2 [shape = 'bf16[8,256]{1,0:T(8,128)(2,1)}', space=vmem, size = 0x1000, scoped, tag = 'scratch operand']
  %s0 = inlined_call_operand.vmem [shape: bf16[8,128], index: 0, kind: input, shape index: {}]
  %s1 = inlined_call_operand.vmem [shape: f32[2,8,128], index: 1, kind: input, shape index: {}, may-alias: {1,8}]
  %s2 = inlined_call_operand.hbm [shape: bf16[128,128], index: 2, kind: input, shape index: {}]
  %s3 = inlined_call_operand.hbm [shape: bf16[2,256,512], index: 3, kind: input, shape index: {}]
  %s4 = inlined_call_operand.vmem [shape: f32[2,1,512], index: 4, kind: input, shape index: {}]
  %s5 = inlined_call_operand.hbm [shape: bf16[128,128], index: 5, kind: input, shape index: {}]
  %s6 = inlined_call_operand.vmem [shape: f32[2,128], index: 6, kind: input, shape index: {}]
  %s7 = inlined_call_operand.vmem [shape: f32[8,128], index: 7, kind: output, shape index: {0}]
  %s8 = inlined_call_operand.vmem [shape: f32[2,8,128], index: 8, kind: output, shape index: {1}, may-alias: {1,8}]
  %9 = xla_tuple %s7, %s8
  %s10 = sld [smem:[#allocation0]]
  $region89: #{decoder_forward.1} parent=0
    _
  %s12 = ssub.s32 1, %s10
  %s13 = scalar_select 0, %s12, %s10
  $region1: #{decoder_forward.1} parent=0
    #allocation3 [shape = 'u8[32768]{0}', space=vmem, size = 0x8000, scoped, tag = 'input window, operand 2, single buffered']
    #allocation4 [shape = 's32[2]{0}', space=sflag, size = 0x8, scoped, tag = 'scoped memory for decoder_forward.1']
    #allocation5 [shape = 'u8[524288]{0}', space=vmem, size = 0x80000, scoped, tag = 'input window, operand 3']
    #allocation6 [shape = 's32[2]{0}', space=sflag, size = 0x8, scoped, tag = 'scoped memory for decoder_forward.1']
    #allocation7 [shape = 'u8[32768]{0}', space=vmem, size = 0x8000, scoped, tag = 'input window, operand 5, single buffered']
    %14 = vsyncpa [#allocation4], 0
    %15 = vsyncpa [#allocation6], 0
    %s16 = scalar_lea.sflag [#allocation6], 1
    %17 = vsyncpa %s16, 0
    loop: start=0, step=1, limit=4
    $region2: #{decoder_forward.1} parent=1 // loop_pre_header
      _
    $region3: #{decoder_forward.1} parent=1 // loop_header
      %s19 = sphi 0, %s23
      %p20 = scmp.ge.s32.totalorder %s19, 4
      %s27 = sphi 0, %s27
      %s29 = sphi 0, %s27
      %s30 = sphi 0, %s29
      %s44 = sphi 0, %s30
      %s50 = sphi 0, %s52
      %s53 = sphi 0, %s50
      %s54 = sphi 0, %s53
      %s70 = sphi 0, %s54
      %s74 = sphi 0, %s74
      %s76 = sphi 0, %s74
      %s77 = sphi 0, %s76
      %s91 = sphi 0, %s77
      %s97 = sphi 0, %s99
      %s100 = sphi 0, %s97
      %s101 = sphi 0, %s100
      %s117 = sphi 0, %s101
      %s123 = sphi 0, %s125
      %s126 = sphi 0, %s123
      %s127 = sphi 0, %s126
      %s143 = sphi 0, %s127
      %s147 = sphi 0, %s147
      %s149 = sphi 0, %s147
      %s150 = sphi 0, %s149
      %s164 = sphi 0, %s150
      %s168 = sphi 0, %s168
      %s170 = sphi 0, %s168
      %s171 = sphi 0, %s170
      %s185 = sphi 0, %s171
      %s189 = sphi 0, %s189
      %s191 = sphi 0, %s189
      %s192 = sphi 0, %s191
      %s206 = sphi 0, %s192
      %s212 = sphi 0, %s214
      %s215 = sphi 0, %s212
      %s216 = sphi 0, %s215
      %s232 = sphi 0, %s216
    $region4: #{decoder_forward.1} parent=1 // loop_header_branch
      %22 = sbr.rel (%p20) target = $region8
    $region5: #{decoder_forward.1} parent=1 // loop_body
      %s24 = ssub.s32 %s19, 1
      %s25 = ssub.s32 %s19, 2
      %s26 = sadd.s32 %s19, 1
      %s28 = sadd.s32 %s27, 1
      %p31 = scmp.eq.s32.totalorder %s19, 1
      %p32 = scmp.ne.s32.totalorder %s27, %s29
      %p33 = scmp.eq.s32.totalorder %s19, 0
      %p34 = por %p32, %p33
      %p35 = scmp.ne.s32.totalorder %s27, %s29
      %p36 = scmp.eq.s32.totalorder %s24, 1
      %p37 = por %p35, %p36
      %p38 = scmp.ne.s32.totalorder %s29, %s30
      %p39 = scmp.eq.s32.totalorder %s24, 0
      %p40 = por %p38, %p39
      %p41 = scmp.ne.s32.totalorder %s29, %s30
      %p42 = scmp.eq.s32.totalorder %s25, 1
      %p43 = por %p41, %p42
      %p45 = scmp.ne.s32.totalorder %s30, %s44
      %p46 = scmp.eq.s32.totalorder %s25, 0
      %p47 = por %p45, %p46
      %s48 = ssub.s32 %s19, %s26
      %p49 = scmp.eq.s32.totalorder %s48, 0
      %s51 = sadd.s32 %s50, 1
      %s52 = scalar_select %p49, %s50, %s51
      %p55 = pneg %p49
      %p56 = scmp.eq.s32.totalorder %s19, 1
      %p57 = por %p55, %p56
      %p58 = scmp.ne.s32.totalorder %s50, %s53
      %p59 = scmp.eq.s32.totalorder %s19, 0
      %p60 = por %p58, %p59
      %p61 = scmp.ne.s32.totalorder %s50, %s53
      %p62 = scmp.eq.s32.totalorder %s24, 1
      %p63 = por %p61, %p62
      %p64 = scmp.ne.s32.totalorder %s53, %s54
      %p65 = scmp.eq.s32.totalorder %s24, 0
      %p66 = por %p64, %p65
      %p67 = scmp.ne.s32.totalorder %s53, %s54
      %p68 = scmp.eq.s32.totalorder %s25, 1
      %p69 = por %p67, %p68
      %p71 = scmp.ne.s32.totalorder %s54, %s70
      %p72 = scmp.eq.s32.totalorder %s25, 0
      %p73 = por %p71, %p72
      %s75 = sadd.s32 %s74, 1
      %p78 = scmp.eq.s32.totalorder %s19, 1
      %p79 = scmp.ne.s32.totalorder %s74, %s76
      %p80 = scmp.eq.s32.totalorder %s19, 0
      %p81 = por %p79, %p80
      %p82 = scmp.ne.s32.totalorder %s74, %s76
      %p83 = scmp.eq.s32.totalorder %s24, 1
      %p84 = por %p82, %p83
      %p85 = scmp.ne.s32.totalorder %s76, %s77
      %p86 = scmp.eq.s32.totalorder %s24, 0
      %p87 = por %p85, %p86
      %p88 = scmp.ne.s32.totalorder %s76, %s77
      %p89 = scmp.eq.s32.totalorder %s25, 1
      %p90 = por %p88, %p89
      %p92 = scmp.ne.s32.totalorder %s77, %s91
      %p93 = scmp.eq.s32.totalorder %s25, 0
      %p94 = por %p92, %p93
      %s95 = ssub.s32 %s19, %s26
      %p96 = scmp.eq.s32.totalorder %s95, 0
      %s98 = sadd.s32 %s97, 1
      %s99 = scalar_select %p96, %s97, %s98
      %p102 = pneg %p96
      %p103 = scmp.eq.s32.totalorder %s19, 1
      %p104 = por %p102, %p103
      %p105 = scmp.ne.s32.totalorder %s97, %s100
      %p106 = scmp.eq.s32.totalorder %s19, 0
      %p107 = por %p105, %p106
      %p108 = scmp.ne.s32.totalorder %s97, %s100
      %p109 = scmp.eq.s32.totalorder %s24, 1
      %p110 = por %p108, %p109
      %p111 = scmp.ne.s32.totalorder %s100, %s101
      %p112 = scmp.eq.s32.totalorder %s24, 0
      %p113 = por %p111, %p112
      %p114 = scmp.ne.s32.totalorder %s100, %s101
      %p115 = scmp.eq.s32.totalorder %s25, 1
      %p116 = por %p114, %p115
      %p118 = scmp.ne.s32.totalorder %s101, %s117
      %p119 = scmp.eq.s32.totalorder %s25, 0
      %p120 = por %p118, %p119
      %s121 = ssub.s32 %s19, %s26
      %p122 = scmp.eq.s32.totalorder %s121, 0
      %s124 = sadd.s32 %s123, 1
      %s125 = scalar_select %p122, %s123, %s124
      %p128 = pneg %p122
      %p129 = scmp.eq.s32.totalorder %s19, 1
      %p130 = por %p128, %p129
      %p131 = scmp.ne.s32.totalorder %s123, %s126
      %p132 = scmp.eq.s32.totalorder %s19, 0
      %p133 = por %p131, %p132
      %p134 = scmp.ne.s32.totalorder %s123, %s126
      %p135 = scmp.eq.s32.totalorder %s24, 1
      %p136 = por %p134, %p135
      %p137 = scmp.ne.s32.totalorder %s126, %s127
      %p138 = scmp.eq.s32.totalorder %s24, 0
      %p139 = por %p137, %p138
      %p140 = scmp.ne.s32.totalorder %s126, %s127
      %p141 = scmp.eq.s32.totalorder %s25, 1
      %p142 = por %p140, %p141
      %p144 = scmp.ne.s32.totalorder %s127, %s143
      %p145 = scmp.eq.s32.totalorder %s25, 0
      %p146 = por %p144, %p145
      %s148 = sadd.s32 %s147, 1
      %p151 = scmp.eq.s32.totalorder %s19, 1
      %p152 = scmp.ne.s32.totalorder %s147, %s149
      %p153 = scmp.eq.s32.totalorder %s19, 0
      %p154 = por %p152, %p153
      %p155 = scmp.ne.s32.totalorder %s147, %s149
      %p156 = scmp.eq.s32.totalorder %s24, 1
      %p157 = por %p155, %p156
      %p158 = scmp.ne.s32.totalorder %s149, %s150
      %p159 = scmp.eq.s32.totalorder %s24, 0
      %p160 = por %p158, %p159
      %p161 = scmp.ne.s32.totalorder %s149, %s150
      %p162 = scmp.eq.s32.totalorder %s25, 1
      %p163 = por %p161, %p162
      %p165 = scmp.ne.s32.totalorder %s150, %s164
      %p166 = scmp.eq.s32.totalorder %s25, 0
      %p167 = por %p165, %p166
      %s169 = sadd.s32 %s168, 1
      %p172 = scmp.eq.s32.totalorder %s19, 1
      %p173 = scmp.ne.s32.totalorder %s168, %s170
      %p174 = scmp.eq.s32.totalorder %s19, 0
      %p175 = por %p173, %p174
      %p176 = scmp.ne.s32.totalorder %s168, %s170
      %p177 = scmp.eq.s32.totalorder %s24, 1
      %p178 = por %p176, %p177
      %p179 = scmp.ne.s32.totalorder %s170, %s171
      %p180 = scmp.eq.s32.totalorder %s24, 0
      %p181 = por %p179, %p180
      %p182 = scmp.ne.s32.totalorder %s170, %s171
      %p183 = scmp.eq.s32.totalorder %s25, 1
      %p184 = por %p182, %p183
      %p186 = scmp.ne.s32.totalorder %s171, %s185
      %p187 = scmp.eq.s32.totalorder %s25, 0
      %p188 = por %p186, %p187
      %s190 = sadd.s32 %s189, 1
      %p193 = scmp.eq.s32.totalorder %s19, 1
      %p194 = scmp.ne.s32.totalorder %s189, %s191
      %p195 = scmp.eq.s32.totalorder %s19, 0
      %p196 = por %p194, %p195
      %p197 = scmp.ne.s32.totalorder %s189, %s191
      %p198 = scmp.eq.s32.totalorder %s24, 1
      %p199 = por %p197, %p198
      %p200 = scmp.ne.s32.totalorder %s191, %s192
      %p201 = scmp.eq.s32.totalorder %s24, 0
      %p202 = por %p200, %p201
      %p203 = scmp.ne.s32.totalorder %s191, %s192
      %p204 = scmp.eq.s32.totalorder %s25, 1
      %p205 = por %p203, %p204
      %p207 = scmp.ne.s32.totalorder %s192, %s206
      %p208 = scmp.eq.s32.totalorder %s25, 0
      %p209 = por %p207, %p208
      %s210 = ssub.s32 %s19, %s26
      %p211 = scmp.eq.s32.totalorder %s210, 0
      %s213 = sadd.s32 %s212, 1
      %s214 = scalar_select %p211, %s212, %s213
      %p217 = pneg %p211
      %p218 = scmp.eq.s32.totalorder %s19, 1
      %p219 = por %p217, %p218
      %p220 = scmp.ne.s32.totalorder %s212, %s215
      %p221 = scmp.eq.s32.totalorder %s19, 0
      %p222 = por %p220, %p221
      %p223 = scmp.ne.s32.totalorder %s212, %s215
      %p224 = scmp.eq.s32.totalorder %s24, 1
      %p225 = por %p223, %p224
      %p226 = scmp.ne.s32.totalorder %s215, %s216
      %p227 = scmp.eq.s32.totalorder %s24, 0
      %p228 = por %p226, %p227
      %p229 = scmp.ne.s32.totalorder %s215, %s216
      %p230 = scmp.eq.s32.totalorder %s25, 1
      %p231 = por %p229, %p230
      %p233 = scmp.ne.s32.totalorder %s216, %s232
      %p234 = scmp.eq.s32.totalorder %s25, 0
      %p235 = por %p233, %p234
      %p236 = scmp.le.s32.totalorder 1, %s19
      %p237 = scmp.lt.s32.totalorder %s19, 3
      %p238 = pnand %p236, %p237
      %p239 = pneg %p238
      // Predicated region
      $region9: #{decoder_forward.1} parent=5 // pred_check
        _
      $region10: #{decoder_forward.1} parent=5 // pred_check_branch
        %241 = sbr.rel (%p238) target = $region12
      $region11: #{decoder_forward.1} parent=5 // pred_region
        %s242 = ssub.s32 %s19, 1
        // Predicated region
        $region13: #{decoder_forward.1} parent=11 // pred_check
          %p243 = pneg %p40
        $region14: #{decoder_forward.1} parent=11 // pred_check_branch
          %245 = sbr.rel (%p243) target = $region16
        $region15: #{decoder_forward.1} parent=11 // pred_region
          _
        $region16: #{decoder_forward.1} parent=11 // pred_fallthru
          _
        // Predicated region
        $region17: #{decoder_forward.1} parent=11 // pred_check
          %p246 = pneg %p87
        $region18: #{decoder_forward.1} parent=11 // pred_check_branch
          %248 = sbr.rel (%p246) target = $region20
        $region19: #{decoder_forward.1} parent=11 // pred_region
          %s250 = ssub.s32 1024, 1024
          %251 = vsyncadd [#allocation4], %s250
          %s252 = sshll.u32 [#allocation3], 4
          %s253 = int_to_ptr.vmem [resolvable:$true] %s252
          %258 = dma.hbm_to_vmem [thread:$0]  %s2, 1024, %s253, [#allocation4], 64, 64, 4
        $region20: #{decoder_forward.1} parent=11 // pred_fallthru
          _
        // Predicated region
        $region21: #{decoder_forward.1} parent=11 // pred_check
          %p259 = pneg %p160
        $region22: #{decoder_forward.1} parent=11 // pred_check_branch
          %261 = sbr.rel (%p259) target = $region24
        $region23: #{decoder_forward.1} parent=11 // pred_region
          %s263 = ssub.s32 1024, 1024
          %264 = vsyncadd [#allocation6], %s263
          %s265 = sshll.u32 [#allocation7], 4
          %s266 = int_to_ptr.vmem [resolvable:$true] %s265
          %271 = dma.hbm_to_vmem [thread:$0]  %s5, 1024, %s266, [#allocation6], 64, 64, 4
        $region24: #{decoder_forward.1} parent=11 // pred_fallthru
          _
        // Predicated region
        $region25: #{decoder_forward.1} parent=11 // pred_check
          %p272 = pneg %p181
        $region26: #{decoder_forward.1} parent=11 // pred_check_branch
          %274 = sbr.rel (%p272) target = $region28
        $region27: #{decoder_forward.1} parent=11 // pred_region
          _
        $region28: #{decoder_forward.1} parent=11 // pred_fallthru
          _
      $region12: #{decoder_forward.1} parent=5 // pred_fallthru
        _
      %p275 = scmp.lt.s32.totalorder %s19, 2
      // Predicated region
      $region29: #{decoder_forward.1} parent=5 // pred_check
        %p276 = pneg %p275
      $region30: #{decoder_forward.1} parent=5 // pred_check_branch
        %278 = sbr.rel (%p276) target = $region32
      $region31: #{decoder_forward.1} parent=5 // pred_region
        // Predicated region
        $region33: #{decoder_forward.1} parent=31 // pred_check
          %p279 = pneg %p60
        $region34: #{decoder_forward.1} parent=31 // pred_check_branch
          %281 = sbr.rel (%p279) target = $region36
        $region35: #{decoder_forward.1} parent=31 // pred_region
          %p282 = scmp.lt.s32.totalorder %s19, 1
          %s283 = scalar_select %p282, %s19, 1
          %s284 = smul.addr %s283, 8
          %s285 = scalar_lea.vmem %s1, %s284
        $region36: #{decoder_forward.1} parent=31 // pred_fallthru
          _
        // Predicated region
        $region37: #{decoder_forward.1} parent=31 // pred_check
          %p286 = pneg %p107
        $region38: #{decoder_forward.1} parent=31 // pred_check_branch
          %288 = sbr.rel (%p286) target = $region40
        $region39: #{decoder_forward.1} parent=31 // pred_region
          %s289 = sand.u32 %s19, 1
          %s290 = scalar_lea.sflag [#allocation6], %s289
          %s291 = sand.u32 %s97, 1
          %s292 = smul.addr %s291, 512
          %s293 = scalar_lea.vmem [#allocation5], %s292
          %s295 = ssub.s32 8192, 8192
          %296 = vsyncadd %s290, %s295
          %s297 = smul.addr %s19, 128
          %s298 = smul.addr %s297, 64
          %s299 = scalar_lea.hbm %s3, %s298
          %s300 = sshll.u32 %s293, 4
          %s301 = int_to_ptr.vmem [resolvable:$true] %s300
          %306 = dma.hbm_to_vmem [thread:$0]  %s299, 8192, %s301, %s290, 256, 256, 16
        $region40: #{decoder_forward.1} parent=31 // pred_fallthru
          _
        // Predicated region
        $region41: #{decoder_forward.1} parent=31 // pred_check
          %p307 = pneg %p133
        $region42: #{decoder_forward.1} parent=31 // pred_check_branch
          %309 = sbr.rel (%p307) target = $region44
        $region43: #{decoder_forward.1} parent=31 // pred_region
          %p310 = scmp.lt.s32.totalorder %s19, 1
          %s311 = scalar_select %p310, %s19, 1
          %s312 = smul.addr %s311, 4
          %s313 = scalar_lea.vmem %s4, %s312
        $region44: #{decoder_forward.1} parent=31 // pred_fallthru
          _
      $region32: #{decoder_forward.1} parent=5 // pred_fallthru
        _
      %p314 = scmp.le.s32.totalorder 1, %s19
      %p315 = scmp.lt.s32.totalorder %s19, 3
      %p316 = pnand %p314, %p315
      %p317 = pneg %p316
      // Predicated region
      $region45: #{decoder_forward.1} parent=5 // pred_check
        _
      $region46: #{decoder_forward.1} parent=5 // pred_check_branch
        %319 = sbr.rel (%p316) target = $region48
      $region47: #{decoder_forward.1} parent=5 // pred_region
        %s320 = ssub.s32 %s19, 1
        // Predicated region
        $region49: #{decoder_forward.1} parent=47 // pred_check
          %p321 = pneg %p87
        $region50: #{decoder_forward.1} parent=47 // pred_check_branch
          %323 = sbr.rel (%p321) target = $region52
        $region51: #{decoder_forward.1} parent=47 // pred_region
          %324 = dma.done [#allocation4], 1024
        $region52: #{decoder_forward.1} parent=47 // pred_fallthru
          _
        %s325 = sand.u32 %s24, 1
        %s326 = scalar_lea.sflag [#allocation6], %s325
        %s327 = sand.u32 %s100, 1
        %s328 = smul.addr %s327, 512
        %s329 = scalar_lea.vmem [#allocation5], %s328
        // Predicated region
        $region53: #{decoder_forward.1} parent=47 // pred_check
          %p330 = pneg %p113
        $region54: #{decoder_forward.1} parent=47 // pred_check_branch
          %332 = sbr.rel (%p330) target = $region56
        $region55: #{decoder_forward.1} parent=47 // pred_region
          %333 = dma.done %s326, 8192
        $region56: #{decoder_forward.1} parent=47 // pred_fallthru
          _
        // Predicated region
        $region57: #{decoder_forward.1} parent=47 // pred_check
          %p334 = pneg %p160
        $region58: #{decoder_forward.1} parent=47 // pred_check_branch
          %336 = sbr.rel (%p334) target = $region60
        $region59: #{decoder_forward.1} parent=47 // pred_region
          %337 = dma.done [#allocation6], 1024
        $region60: #{decoder_forward.1} parent=47 // pred_fallthru
          _
        %p338 = pneg %p40
        %p339 = pneg %p37
        %p340 = scmp.lt.s32.totalorder %s24, 1
        %s341 = scalar_select %p340, %s24, 1
        %s342 = smul.addr %s341, 8
        %s343 = scalar_lea.vmem %s1, %s342
        %p344 = pneg %p66
        %p345 = pneg %p63
        %p346 = pneg %p87
        %p347 = pneg %p84
        %s348 = sand.u32 %s24, 1
        %s349 = scalar_lea.sflag [#allocation6], %s348
        %s350 = sand.u32 %s100, 1
        %s351 = smul.addr %s350, 512
        %s352 = scalar_lea.vmem [#allocation5], %s351
        %p353 = pneg %p113
        %p354 = pneg %p110
        %p355 = scmp.lt.s32.totalorder %s24, 1
        %s356 = scalar_select %p355, %s24, 1
        %s357 = smul.addr %s356, 4
        %s358 = scalar_lea.vmem %s4, %s357
        %p359 = pneg %p139
        %p360 = pneg %p136
        %p361 = pneg %p160
        %p362 = pneg %p157
        %p363 = pneg %p181
        %p364 = pneg %p178
        %p365 = pneg %p202
        %p366 = pneg %p199
        %p367 = pneg %p228
        %p368 = pneg %p225
        %p369 = scmp.lt.s32.totalorder %s24, 1
        %s370 = scalar_select %p369, %s24, 1
        %s371 = smul.addr %s370, 8
        %s372 = scalar_lea.vmem %s8, %s371
        %p373 = scmp.lt.s32.totalorder %s24, 1
        %s374 = scalar_select %p373, %s24, 1
        %s375 = smul.addr %s374, 8
        %s376 = scalar_lea.vmem %s1, %s375
        %p377 = scmp.lt.s32.totalorder %s24, 1
        %s378 = scalar_select %p377, %s24, 1
        %s379 = smul.addr %s378, 4
        %s380 = scalar_lea.vmem %s4, %s379
        %p381 = scmp.lt.s32.totalorder %s24, 1
        %s382 = scalar_select %p381, %s24, 1
        %s383 = smul.addr %s382, 8
        %s384 = scalar_lea.vmem %s8, %s383
        %p386 = scmp.eq.s32.totalorder %s24, 0
        // Predicated region
        $region61: #{decoder_forward.1} parent=47 // pred_check
          %p387 = pneg %p386
        $region62: #{decoder_forward.1} parent=47 // pred_check_branch
          %389 = sbr.rel (%p387) target = $region64
        $region63: #{decoder_forward.1} parent=47 // pred_region
          %v390 = vld [vmem:[%s0] sm:$0xf]
          %v391 = vld [vmem:[#allocation3] sm:$0xf]
          %v392 = vld [vmem:[#allocation3 + $0x4] sm:$0xf]
          %v393 = vld [vmem:[#allocation3 + $0x8] sm:$0xf]
          %v394 = vld [vmem:[#allocation3 + $0xc] sm:$0xf]
          %v395 = vld [vmem:[#allocation3 + $0x10] sm:$0xf]
          %v396 = vld [vmem:[#allocation3 + $0x14] sm:$0xf]
          %v397 = vld [vmem:[#allocation3 + $0x18] sm:$0xf]
          %v398 = vld [vmem:[#allocation3 + $0x1c] sm:$0xf]
          %v399 = vld [vmem:[#allocation3 + $0x20] sm:$0xf]
          %v400 = vld [vmem:[#allocation3 + $0x24] sm:$0xf]
          %v401 = vld [vmem:[#allocation3 + $0x28] sm:$0xf]
          %v402 = vld [vmem:[#allocation3 + $0x2c] sm:$0xf]
          %v403 = vld [vmem:[#allocation3 + $0x30] sm:$0xf]
          %v404 = vld [vmem:[#allocation3 + $0x34] sm:$0xf]
          %v405 = vld [vmem:[#allocation3 + $0x38] sm:$0xf]
          %v406 = vld [vmem:[#allocation3 + $0x3c] sm:$0xf]
          %v407 = vld [vmem:[%s6] sm:$0x1]
          %v408 = vlaneseq
          %v409 = vshrl.u32 %v408, 7
          %v410 = vsub.s32 0, %v409
          %v411 = vrot.slane %v407, %v410
          %v428 = vunpack.c.l.b16 %v391
          %v429 = vunpack.c.l.b16 %v392
          %v430 = vunpack.c.l.b16 %v393
          %v431 = vunpack.c.l.b16 %v394
          %v432 = vunpack.c.l.b16 %v395
          %v433 = vunpack.c.l.b16 %v396
          %v434 = vunpack.c.l.b16 %v397
          %v435 = vunpack.c.l.b16 %v398
          %v436 = vunpack.c.l.b16 %v399
          %v437 = vunpack.c.l.b16 %v400
          %v438 = vunpack.c.l.b16 %v401
          %v439 = vunpack.c.l.b16 %v402
          %v440 = vunpack.c.l.b16 %v403
          %v441 = vunpack.c.l.b16 %v404
          %v442 = vunpack.c.l.b16 %v405
          %v443 = vunpack.c.l.b16 %v406
          %v444 = vpack.c.b16 %v429, %v428
          %v445 = vpack.c.b16 %v431, %v430
          %v446 = vpack.c.b16 %v433, %v432
          %v447 = vpack.c.b16 %v435, %v434
          %v448 = vpack.c.b16 %v437, %v436
          %v449 = vpack.c.b16 %v439, %v438
          %v450 = vpack.c.b16 %v441, %v440
          %v451 = vpack.c.b16 %v443, %v442
          %460 = vmatprep.subr.bf16.mxu0 0
          %461 = vmatpush1.bf16.msra.mxu0 %v444
          %462 = vmatprep.subr.bf16.mxu0 0
          %463 = vmatpush1.bf16.msra.mxu0 %v445
          %464 = vmatprep.subr.bf16.mxu0 0
          %465 = vmatpush1.bf16.msra.mxu0 %v446
          %466 = vmatprep.subr.bf16.mxu0 0
          %467 = vmatpush1.bf16.msra.mxu0 %v447
          %468 = vmatprep.subr.bf16.mxu0 0
          %469 = vmatpush1.bf16.msra.mxu0 %v448
          %470 = vmatprep.subr.bf16.mxu0 0
          %471 = vmatpush1.bf16.msra.mxu0 %v449
          %472 = vmatprep.subr.bf16.mxu0 0
          %473 = vmatpush1.bf16.msra.mxu0 %v450
          %474 = vmatprep.subr.bf16.mxu0 0
          %475 = vmatpush1.bf16.msra.mxu0 %v451
          %476 = vmatprep.subr.bf16.mxu0 0
          %477 = vmatpush1.bf16.msra.mxu0 0
          %478 = vmatprep.subr.bf16.mxu0 0
          %479 = vmatpush1.bf16.msra.mxu0 0
          %480 = vmatprep.subr.bf16.mxu0 0
          %481 = vmatpush1.bf16.msra.mxu0 0
          %482 = vmatprep.subr.bf16.mxu0 0
          %483 = vmatpush1.bf16.msra.mxu0 0
          %484 = vmatprep.subr.bf16.mxu0 0
          %485 = vmatpush1.bf16.msra.mxu0 0
          %486 = vmatprep.subr.bf16.mxu0 0
          %487 = vmatpush1.bf16.msra.mxu0 0
          %488 = vmatprep.subr.bf16.mxu0 0
          %489 = vmatpush1.bf16.msra.mxu0 0
          %490 = vmatprep.subr.bf16.mxu0 0
          %491 = vmatpush1.bf16.msra.mxu0 0
          %492 = vmatprep.mubr.bf16.mxu0 0
          %493 = vmatmul.mubr.bf16.gmra.mrb[0].mxu0 %v390
          %v494 = vpop.f32.mrb[0].mxu0
          %v495 = vadd.f32 %v411, %v494
          %v496 = vpop.f32.mrb[0].mxu0
          %v497 = vpop.f32.mrb[0].mxu0
          %v498 = vpop.f32.mrb[0].mxu0
          %499 = vdwg.mxu0
          %v500 = vpack.c.bf16 %v495, %v495
          %501 = vst [vmem:[#allocation2] sm:$0xf] %v500
        $region64: #{decoder_forward.1} parent=47 // pred_fallthru
          _
        %v502 = vld [vmem:[%s376] sm:$0xff]
        %v503 = vpack.c.bf16 %v502, %v502
        %504 = vst [vmem:[#allocation2 + $0x4] sm:$0xf] %v503
        %v505 = vld [vmem:[#allocation2] sm:$0xff]
        %v506 = vld [vmem:[%s329] sm:$0xff]
        %v507 = vld [vmem:[%s329 + $0x8] sm:$0xff]
        %v508 = vld [vmem:[%s329 + $0x10] sm:$0xff]
        %v509 = vld [vmem:[%s329 + $0x18] sm:$0xff]
        %v510 = vld [vmem:[%s329 + $0x20] sm:$0xff]
        %v511 = vld [vmem:[%s329 + $0x28] sm:$0xff]
        %v512 = vld [vmem:[%s329 + $0x30] sm:$0xff]
        %v513 = vld [vmem:[%s329 + $0x38] sm:$0xff]
        %v514 = vld [vmem:[%s329 + $0x40] sm:$0xff]
        %v515 = vld [vmem:[%s329 + $0x48] sm:$0xff]
        %v516 = vld [vmem:[%s329 + $0x50] sm:$0xff]
        %v517 = vld [vmem:[%s329 + $0x58] sm:$0xff]
        %v518 = vld [vmem:[%s329 + $0x60] sm:$0xff]
        %v519 = vld [vmem:[%s329 + $0x68] sm:$0xff]
        %v520 = vld [vmem:[%s329 + $0x70] sm:$0xff]
        %v521 = vld [vmem:[%s329 + $0x78] sm:$0xff]
        %v522 = vld [vmem:[%s329 + $0x80] sm:$0xff]
        %v523 = vld [vmem:[%s329 + $0x88] sm:$0xff]
        %v524 = vld [vmem:[%s329 + $0x90] sm:$0xff]
        %v525 = vld [vmem:[%s329 + $0x98] sm:$0xff]
        %v526 = vld [vmem:[%s329 + $0xa0] sm:$0xff]
        %v527 = vld [vmem:[%s329 + $0xa8] sm:$0xff]
        %v528 = vld [vmem:[%s329 + $0xb0] sm:$0xff]
        %v529 = vld [vmem:[%s329 + $0xb8] sm:$0xff]
        %v530 = vld [vmem:[%s329 + $0xc0] sm:$0xff]
        %v531 = vld [vmem:[%s329 + $0xc8] sm:$0xff]
        %v532 = vld [vmem:[%s329 + $0xd0] sm:$0xff]
        %v533 = vld [vmem:[%s329 + $0xd8] sm:$0xff]
        %v534 = vld [vmem:[%s329 + $0xe0] sm:$0xff]
        %v535 = vld [vmem:[%s329 + $0xe8] sm:$0xff]
        %v536 = vld [vmem:[%s329 + $0xf0] sm:$0xff]
        %v537 = vld [vmem:[%s329 + $0xf8] sm:$0xff]
        %v538 = vld [vmem:[%s329 + $0x100] sm:$0xff]
        %v539 = vld [vmem:[%s329 + $0x108] sm:$0xff]
        %v540 = vld [vmem:[%s329 + $0x110] sm:$0xff]
        %v541 = vld [vmem:[%s329 + $0x118] sm:$0xff]
        %v542 = vld [vmem:[%s329 + $0x120] sm:$0xff]
        %v543 = vld [vmem:[%s329 + $0x128] sm:$0xff]
        %v544 = vld [vmem:[%s329 + $0x130] sm:$0xff]
        %v545 = vld [vmem:[%s329 + $0x138] sm:$0xff]
        %v546 = vld [vmem:[%s329 + $0x140] sm:$0xff]
        %v547 = vld [vmem:[%s329 + $0x148] sm:$0xff]
        %v548 = vld [vmem:[%s329 + $0x150] sm:$0xff]
        %v549 = vld [vmem:[%s329 + $0x158] sm:$0xff]
        %v550 = vld [vmem:[%s329 + $0x160] sm:$0xff]
        %v551 = vld [vmem:[%s329 + $0x168] sm:$0xff]
        %v552 = vld [vmem:[%s329 + $0x170] sm:$0xff]
        %v553 = vld [vmem:[%s329 + $0x178] sm:$0xff]
        %v554 = vld [vmem:[%s329 + $0x180] sm:$0xff]
        %v555 = vld [vmem:[%s329 + $0x188] sm:$0xff]
        %v556 = vld [vmem:[%s329 + $0x190] sm:$0xff]
        %v557 = vld [vmem:[%s329 + $0x198] sm:$0xff]
        %v558 = vld [vmem:[%s329 + $0x1a0] sm:$0xff]
        %v559 = vld [vmem:[%s329 + $0x1a8] sm:$0xff]
        %v560 = vld [vmem:[%s329 + $0x1b0] sm:$0xff]
        %v561 = vld [vmem:[%s329 + $0x1b8] sm:$0xff]
        %v562 = vld [vmem:[%s329 + $0x1c0] sm:$0xff]
        %v563 = vld [vmem:[%s329 + $0x1c8] sm:$0xff]
        %v564 = vld [vmem:[%s329 + $0x1d0] sm:$0xff]
        %v565 = vld [vmem:[%s329 + $0x1d8] sm:$0xff]
        %v566 = vld [vmem:[%s329 + $0x1e0] sm:$0xff]
        %v567 = vld [vmem:[%s329 + $0x1e8] sm:$0xff]
        %v568 = vld [vmem:[%s329 + $0x1f0] sm:$0xff]
        %v569 = vld [vmem:[%s329 + $0x1f8] sm:$0xff]
        %v570 = vld [vmem:[%s380] sm:$0xf]
        %v572 = vlaneseq
        %v573 = vshrl.u32 %v572, 7
        %v574 = vsub.s32 0, %v573
        %v575 = vrot.slane %v570, %v574
        %v576 = vlaneseq
        %v577 = vshrl.u32 %v576, 7
        %v578 = vsub.s32 1, %v577
        %v579 = vrot.slane %v570, %v578
        %v580 = vlaneseq
        %v581 = vshrl.u32 %v580, 7
        %v582 = vsub.s32 2, %v581
        %v583 = vrot.slane %v570, %v582
        %v584 = vlaneseq
        %v585 = vshrl.u32 %v584, 7
        %v586 = vsub.s32 3, %v585
        %v587 = vrot.slane %v570, %v586
        %v593 = vunpack.c.l.b16 %v505
        %v594 = vunpack.c.h.b16 %v505
        %v595 = vpack.c.b16 %v593, %v593
        %v596 = vpack.c.b16 %v594, %v594
        %v663 = vunpack.c.l.b16 %v506
        %v664 = vunpack.c.h.b16 %v506
        %v665 = vunpack.c.l.b16 %v507
        %v666 = vunpack.c.h.b16 %v507
        %v667 = vunpack.c.l.b16 %v508
        %v668 = vunpack.c.h.b16 %v508
        %v669 = vunpack.c.l.b16 %v509
        %v670 = vunpack.c.h.b16 %v509
        %v671 = vunpack.c.l.b16 %v510
        %v672 = vunpack.c.h.b16 %v510
        %v673 = vunpack.c.l.b16 %v511
        %v674 = vunpack.c.h.b16 %v511
        %v675 = vunpack.c.l.b16 %v512
        %v676 = vunpack.c.h.b16 %v512
        %v677 = vunpack.c.l.b16 %v513
        %v678 = vunpack.c.h.b16 %v513
        %v679 = vunpack.c.l.b16 %v514
        %v680 = vunpack.c.h.b16 %v514
        %v681 = vunpack.c.l.b16 %v515
        %v682 = vunpack.c.h.b16 %v515
        %v683 = vunpack.c.l.b16 %v516
        %v684 = vunpack.c.h.b16 %v516
        %v685 = vunpack.c.l.b16 %v517
        %v686 = vunpack.c.h.b16 %v517
        %v687 = vunpack.c.l.b16 %v518
        %v688 = vunpack.c.h.b16 %v518
        %v689 = vunpack.c.l.b16 %v519
        %v690 = vunpack.c.h.b16 %v519
        %v691 = vunpack.c.l.b16 %v520
        %v692 = vunpack.c.h.b16 %v520
        %v693 = vunpack.c.l.b16 %v521
        %v694 = vunpack.c.h.b16 %v521
        %v695 = vunpack.c.l.b16 %v522
        %v696 = vunpack.c.h.b16 %v522
        %v697 = vunpack.c.l.b16 %v523
        %v698 = vunpack.c.h.b16 %v523
        %v699 = vunpack.c.l.b16 %v524
        %v700 = vunpack.c.h.b16 %v524
        %v701 = vunpack.c.l.b16 %v525
        %v702 = vunpack.c.h.b16 %v525
        %v703 = vunpack.c.l.b16 %v526
        %v704 = vunpack.c.h.b16 %v526
        %v705 = vunpack.c.l.b16 %v527
        %v706 = vunpack.c.h.b16 %v527
        %v707 = vunpack.c.l.b16 %v528
        %v708 = vunpack.c.h.b16 %v528
        %v709 = vunpack.c.l.b16 %v529
        %v710 = vunpack.c.h.b16 %v529
        %v711 = vunpack.c.l.b16 %v530
        %v712 = vunpack.c.h.b16 %v530
        %v713 = vunpack.c.l.b16 %v531
        %v714 = vunpack.c.h.b16 %v531
        %v715 = vunpack.c.l.b16 %v532
        %v716 = vunpack.c.h.b16 %v532
        %v717 = vunpack.c.l.b16 %v533
        %v718 = vunpack.c.h.b16 %v533
        %v719 = vunpack.c.l.b16 %v534
        %v720 = vunpack.c.h.b16 %v534
        %v721 = vunpack.c.l.b16 %v535
        %v722 = vunpack.c.h.b16 %v535
        %v723 = vunpack.c.l.b16 %v536
        %v724 = vunpack.c.h.b16 %v536
        %v725 = vunpack.c.l.b16 %v537
        %v726 = vunpack.c.h.b16 %v537
        %v727 = vunpack.c.l.b16 %v538
        %v728 = vunpack.c.h.b16 %v538
        %v729 = vunpack.c.l.b16 %v539
        %v730 = vunpack.c.h.b16 %v539
        %v731 = vunpack.c.l.b16 %v540
        %v732 = vunpack.c.h.b16 %v540
        %v733 = vunpack.c.l.b16 %v541
        %v734 = vunpack.c.h.b16 %v541
        %v735 = vunpack.c.l.b16 %v542
        %v736 = vunpack.c.h.b16 %v542
        %v737 = vunpack.c.l.b16 %v543
        %v738 = vunpack.c.h.b16 %v543
        %v739 = vunpack.c.l.b16 %v544
        %v740 = vunpack.c.h.b16 %v544
        %v741 = vunpack.c.l.b16 %v545
        %v742 = vunpack.c.h.b16 %v545
        %v743 = vunpack.c.l.b16 %v546
        %v744 = vunpack.c.h.b16 %v546
        %v745 = vunpack.c.l.b16 %v547
        %v746 = vunpack.c.h.b16 %v547
        %v747 = vunpack.c.l.b16 %v548
        %v748 = vunpack.c.h.b16 %v548
        %v749 = vunpack.c.l.b16 %v549
        %v750 = vunpack.c.h.b16 %v549
        %v751 = vunpack.c.l.b16 %v550
        %v752 = vunpack.c.h.b16 %v550
        %v753 = vunpack.c.l.b16 %v551
        %v754 = vunpack.c.h.b16 %v551
        %v755 = vunpack.c.l.b16 %v552
        %v756 = vunpack.c.h.b16 %v552
        %v757 = vunpack.c.l.b16 %v553
        %v758 = vunpack.c.h.b16 %v553
        %v759 = vunpack.c.l.b16 %v554
        %v760 = vunpack.c.h.b16 %v554
        %v761 = vunpack.c.l.b16 %v555
        %v762 = vunpack.c.h.b16 %v555
        %v763 = vunpack.c.l.b16 %v556
        %v764 = vunpack.c.h.b16 %v556
        %v765 = vunpack.c.l.b16 %v557
        %v766 = vunpack.c.h.b16 %v557
        %v767 = vunpack.c.l.b16 %v558
        %v768 = vunpack.c.h.b16 %v558
        %v769 = vunpack.c.l.b16 %v559
        %v770 = vunpack.c.h.b16 %v559
        %v771 = vunpack.c.l.b16 %v560
        %v772 = vunpack.c.h.b16 %v560
        %v773 = vunpack.c.l.b16 %v561
        %v774 = vunpack.c.h.b16 %v561
        %v775 = vunpack.c.l.b16 %v562
        %v776 = vunpack.c.h.b16 %v562
        %v777 = vunpack.c.l.b16 %v563
        %v778 = vunpack.c.h.b16 %v563
        %v779 = vunpack.c.l.b16 %v564
        %v780 = vunpack.c.h.b16 %v564
        %v781 = vunpack.c.l.b16 %v565
        %v782 = vunpack.c.h.b16 %v565
        %v783 = vunpack.c.l.b16 %v566
        %v784 = vunpack.c.h.b16 %v566
        %v785 = vunpack.c.l.b16 %v567
        %v786 = vunpack.c.h.b16 %v567
        %v787 = vunpack.c.l.b16 %v568
        %v788 = vunpack.c.h.b16 %v568
        %v789 = vunpack.c.l.b16 %v569
        %v790 = vunpack.c.h.b16 %v569
        %v791 = vpack.c.b16 %v667, %v663
        %v792 = vpack.c.b16 %v668, %v664
        %v793 = vpack.c.b16 %v669, %v665
        %v794 = vpack.c.b16 %v670, %v666
        %v795 = vpack.c.b16 %v675, %v671
        %v796 = vpack.c.b16 %v676, %v672
        %v797 = vpack.c.b16 %v677, %v673
        %v798 = vpack.c.b16 %v678, %v674
        %v799 = vpack.c.b16 %v683, %v679
        %v800 = vpack.c.b16 %v684, %v680
        %v801 = vpack.c.b16 %v685, %v681
        %v802 = vpack.c.b16 %v686, %v682
        %v803 = vpack.c.b16 %v691, %v687
        %v804 = vpack.c.b16 %v692, %v688
        %v805 = vpack.c.b16 %v693, %v689
        %v806 = vpack.c.b16 %v694, %v690
        %v807 = vpack.c.b16 %v699, %v695
        %v808 = vpack.c.b16 %v700, %v696
        %v809 = vpack.c.b16 %v701, %v697
        %v810 = vpack.c.b16 %v702, %v698
        %v811 = vpack.c.b16 %v707, %v703
        %v812 = vpack.c.b16 %v708, %v704
        %v813 = vpack.c.b16 %v709, %v705
        %v814 = vpack.c.b16 %v710, %v706
        %v815 = vpack.c.b16 %v715, %v711
        %v816 = vpack.c.b16 %v716, %v712
        %v817 = vpack.c.b16 %v717, %v713
        %v818 = vpack.c.b16 %v718, %v714
        %v819 = vpack.c.b16 %v723, %v719
        %v820 = vpack.c.b16 %v724, %v720
        %v821 = vpack.c.b16 %v725, %v721
        %v822 = vpack.c.b16 %v726, %v722
        %v823 = vpack.c.b16 %v731, %v727
        %v824 = vpack.c.b16 %v732, %v728
        %v825 = vpack.c.b16 %v733, %v729
        %v826 = vpack.c.b16 %v734, %v730
        %v827 = vpack.c.b16 %v739, %v735
        %v828 = vpack.c.b16 %v740, %v736
        %v829 = vpack.c.b16 %v741, %v737
        %v830 = vpack.c.b16 %v742, %v738
        %v831 = vpack.c.b16 %v747, %v743
        %v832 = vpack.c.b16 %v748, %v744
        %v833 = vpack.c.b16 %v749, %v745
        %v834 = vpack.c.b16 %v750, %v746
        %v835 = vpack.c.b16 %v755, %v751
        %v836 = vpack.c.b16 %v756, %v752
        %v837 = vpack.c.b16 %v757, %v753
        %v838 = vpack.c.b16 %v758, %v754
        %v839 = vpack.c.b16 %v763, %v759
        %v840 = vpack.c.b16 %v764, %v760
        %v841 = vpack.c.b16 %v765, %v761
        %v842 = vpack.c.b16 %v766, %v762
        %v843 = vpack.c.b16 %v771, %v767
        %v844 = vpack.c.b16 %v772, %v768
        %v845 = vpack.c.b16 %v773, %v769
        %v846 = vpack.c.b16 %v774, %v770
        %v847 = vpack.c.b16 %v779, %v775
        %v848 = vpack.c.b16 %v780, %v776
        %v849 = vpack.c.b16 %v781, %v777
        %v850 = vpack.c.b16 %v782, %v778
        %v851 = vpack.c.b16 %v787, %v783
        %v852 = vpack.c.b16 %v788, %v784
        %v853 = vpack.c.b16 %v789, %v785
        %v854 = vpack.c.b16 %v790, %v786
        %919 = vmatprep.subr.bf16.mxu0 %v792
        %920 = vmatpush1.bf16.msra.mxu0 %v791
        %921 = vmatprep.subr.bf16.mxu0 %v796
        %922 = vmatpush1.bf16.msra.mxu0 %v795
        %923 = vmatprep.subr.bf16.mxu0 %v800
        %924 = vmatpush1.bf16.msra.mxu0 %v799
        %925 = vmatprep.subr.bf16.mxu0 %v804
        %926 = vmatpush1.bf16.msra.mxu0 %v803
        %927 = vmatprep.subr.bf16.mxu0 %v808
        %928 = vmatpush1.bf16.msra.mxu0 %v807
        %929 = vmatprep.subr.bf16.mxu0 %v812
        %930 = vmatpush1.bf16.msra.mxu0 %v811
        %931 = vmatprep.subr.bf16.mxu0 %v816
        %932 = vmatpush1.bf16.msra.mxu0 %v815
        %933 = vmatprep.subr.bf16.mxu0 %v820
        %934 = vmatpush1.bf16.msra.mxu0 %v819
        %935 = vmatprep.subr.bf16.mxu0 %v824
        %936 = vmatpush1.bf16.msra.mxu0 %v823
        %937 = vmatprep.subr.bf16.mxu0 %v828
        %938 = vmatpush1.bf16.msra.mxu0 %v827
        %939 = vmatprep.subr.bf16.mxu0 %v832
        %940 = vmatpush1.bf16.msra.mxu0 %v831
        %941 = vmatprep.subr.bf16.mxu0 %v836
        %942 = vmatpush1.bf16.msra.mxu0 %v835
        %943 = vmatprep.subr.bf16.mxu0 %v840
        %944 = vmatpush1.bf16.msra.mxu0 %v839
        %945 = vmatprep.subr.bf16.mxu0 %v844
        %946 = vmatpush1.bf16.msra.mxu0 %v843
        %947 = vmatprep.subr.bf16.mxu0 %v848
        %948 = vmatpush1.bf16.msra.mxu0 %v847
        %949 = vmatprep.subr.bf16.mxu0 %v852
        %950 = vmatpush1.bf16.msra.mxu0 %v851
        %951 = vmatprep.mubr.bf16.mxu0 %v596
        %952 = vmatmul.mubr.bf16.gmra.mrb[0].mxu0 %v595
        %v953 = vpop.f32.mrb[0].mxu0
        %v954 = vadd.f32 %v575, %v953
        %v955 = vpop.f32.mrb[0].mxu0
        %v956 = vadd.f32 %v579, %v955
        %v957 = vpop.f32.mrb[0].mxu0
        %v958 = vpop.f32.mrb[0].mxu0
        %959 = vdwg.mxu0
        %960 = vmatprep.subr.bf16.mxu0 %v794
        %961 = vmatpush1.bf16.msra.mxu0 %v793
        %962 = vmatprep.subr.bf16.mxu0 %v798
        %963 = vmatpush1.bf16.msra.mxu0 %v797
        %964 = vmatprep.subr.bf16.mxu0 %v802
        %965 = vmatpush1.bf16.msra.mxu0 %v801
        %966 = vmatprep.subr.bf16.mxu0 %v806
        %967 = vmatpush1.bf16.msra.mxu0 %v805
        %968 = vmatprep.subr.bf16.mxu0 %v810
        %969 = vmatpush1.bf16.msra.mxu0 %v809
        %970 = vmatprep.subr.bf16.mxu0 %v814
        %971 = vmatpush1.bf16.msra.mxu0 %v813
        %972 = vmatprep.subr.bf16.mxu0 %v818
        %973 = vmatpush1.bf16.msra.mxu0 %v817
        %974 = vmatprep.subr.bf16.mxu0 %v822
        %975 = vmatpush1.bf16.msra.mxu0 %v821
        %976 = vmatprep.subr.bf16.mxu0 %v826
        %977 = vmatpush1.bf16.msra.mxu0 %v825
        %978 = vmatprep.subr.bf16.mxu0 %v830
        %979 = vmatpush1.bf16.msra.mxu0 %v829
        %980 = vmatprep.subr.bf16.mxu0 %v834
        %981 = vmatpush1.bf16.msra.mxu0 %v833
        %982 = vmatprep.subr.bf16.mxu0 %v838
        %983 = vmatpush1.bf16.msra.mxu0 %v837
        %984 = vmatprep.subr.bf16.mxu0 %v842
        %985 = vmatpush1.bf16.msra.mxu0 %v841
        %986 = vmatprep.subr.bf16.mxu0 %v846
        %987 = vmatpush1.bf16.msra.mxu0 %v845
        %988 = vmatprep.subr.bf16.mxu0 %v850
        %989 = vmatpush1.bf16.msra.mxu0 %v849
        %990 = vmatprep.subr.bf16.mxu0 %v854
        %991 = vmatpush1.bf16.msra.mxu0 %v853
        %992 = vmatprep.mubr.bf16.mxu0 %v596
        %993 = vmatmul.mubr.bf16.gmra.mrb[0].mxu0 %v595
        %v994 = vpop.f32.mrb[0].mxu0
        %v995 = vadd.f32 %v583, %v994
        %v996 = vpop.f32.mrb[0].mxu0
        %v997 = vadd.f32 %v587, %v996
        %v998 = vpop.f32.mrb[0].mxu0
        %v999 = vpop.f32.mrb[0].mxu0
        %1000 = vdwg.mxu0
        %v1001 = vxor.u32 %v954, 2147483648
        %v1002 = vxor.u32 %v956, 2147483648
        %v1003 = vmul.f32 %v1001, 1.442695
        %v1004 = vpow.pop %v1003
        %v1005 = vmul.f32 %v1002, 1.442695
        %v1006 = vpow.pop %v1005
        %v1007 = vadd.f32 %v1004, 1.0
        %v1008 = vadd.f32 %v1006, 1.0
        %v1009 = vrcp.pop %v1007
        %v1010 = vmul.f32 1.0, %v1009
        %v1011 = vrcp.pop %v1008
        %v1012 = vmul.f32 1.0, %v1011
        %v1013 = vmul.f32 %v1010, %v997
        %v1014 = vadd.f32 %v995, %v1013
        %v1015 = vtanh.pop %v1014
        %v1016 = vsub.f32 %v502, %v1015
        %v1017 = vmul.f32 %v1012, %v1016
        %v1018 = vadd.f32 %v1015, %v1017
        %1019 = vst [vmem:[%s384] sm:$0xff] %v1018
        %v1020 = vpack.c.bf16 %v1018, %v1018
        %1021 = vst [vmem:[#allocation2] sm:$0xf] %v1020
        %p1022 = scmp.eq.s32.totalorder %s24, 1
        // Predicated region
        $region65: #{decoder_forward.1} parent=47 // pred_check
          %p1023 = pneg %p1022
        $region66: #{decoder_forward.1} parent=47 // pred_check_branch
          %1025 = sbr.rel (%p1023) target = $region68
        $region67: #{decoder_forward.1} parent=47 // pred_region
          %v1026 = vld [vmem:[#allocation7] sm:$0xf]
          %v1027 = vld [vmem:[#allocation7 + $0x4] sm:$0xf]
          %v1028 = vld [vmem:[#allocation7 + $0x8] sm:$0xf]
          %v1029 = vld [vmem:[#allocation7 + $0xc] sm:$0xf]
          %v1030 = vld [vmem:[#allocation7 + $0x10] sm:$0xf]
          %v1031 = vld [vmem:[#allocation7 + $0x14] sm:$0xf]
          %v1032 = vld [vmem:[#allocation7 + $0x18] sm:$0xf]
          %v1033 = vld [vmem:[#allocation7 + $0x1c] sm:$0xf]
          %v1034 = vld [vmem:[#allocation7 + $0x20] sm:$0xf]
          %v1035 = vld [vmem:[#allocation7 + $0x24] sm:$0xf]
          %v1036 = vld [vmem:[#allocation7 + $0x28] sm:$0xf]
          %v1037 = vld [vmem:[#allocation7 + $0x2c] sm:$0xf]
          %v1038 = vld [vmem:[#allocation7 + $0x30] sm:$0xf]
          %v1039 = vld [vmem:[#allocation7 + $0x34] sm:$0xf]
          %v1040 = vld [vmem:[#allocation7 + $0x38] sm:$0xf]
          %v1041 = vld [vmem:[#allocation7 + $0x3c] sm:$0xf]
          %v1042 = vld [vmem:[%s6 + $0x1] sm:$0x1]
          %v1043 = vlaneseq
          %v1044 = vshrl.u32 %v1043, 7
          %v1045 = vsub.s32 0, %v1044
          %v1046 = vrot.slane %v1042, %v1045
          %v1063 = vunpack.c.l.b16 %v1026
          %v1064 = vunpack.c.l.b16 %v1027
          %v1065 = vunpack.c.l.b16 %v1028
          %v1066 = vunpack.c.l.b16 %v1029
          %v1067 = vunpack.c.l.b16 %v1030
          %v1068 = vunpack.c.l.b16 %v1031
          %v1069 = vunpack.c.l.b16 %v1032
          %v1070 = vunpack.c.l.b16 %v1033
          %v1071 = vunpack.c.l.b16 %v1034
          %v1072 = vunpack.c.l.b16 %v1035
          %v1073 = vunpack.c.l.b16 %v1036
          %v1074 = vunpack.c.l.b16 %v1037
          %v1075 = vunpack.c.l.b16 %v1038
          %v1076 = vunpack.c.l.b16 %v1039
          %v1077 = vunpack.c.l.b16 %v1040
          %v1078 = vunpack.c.l.b16 %v1041
          %v1079 = vpack.c.b16 %v1064, %v1063
          %v1080 = vpack.c.b16 %v1066, %v1065
          %v1081 = vpack.c.b16 %v1068, %v1067
          %v1082 = vpack.c.b16 %v1070, %v1069
          %v1083 = vpack.c.b16 %v1072, %v1071
          %v1084 = vpack.c.b16 %v1074, %v1073
          %v1085 = vpack.c.b16 %v1076, %v1075
          %v1086 = vpack.c.b16 %v1078, %v1077
          %1095 = vmatprep.subr.bf16.mxu0 0
          %1096 = vmatpush1.bf16.msra.mxu0 %v1079
          %1097 = vmatprep.subr.bf16.mxu0 0
          %1098 = vmatpush1.bf16.msra.mxu0 %v1080
          %1099 = vmatprep.subr.bf16.mxu0 0
          %1100 = vmatpush1.bf16.msra.mxu0 %v1081
          %1101 = vmatprep.subr.bf16.mxu0 0
          %1102 = vmatpush1.bf16.msra.mxu0 %v1082
          %1103 = vmatprep.subr.bf16.mxu0 0
          %1104 = vmatpush1.bf16.msra.mxu0 %v1083
          %1105 = vmatprep.subr.bf16.mxu0 0
          %1106 = vmatpush1.bf16.msra.mxu0 %v1084
          %1107 = vmatprep.subr.bf16.mxu0 0
          %1108 = vmatpush1.bf16.msra.mxu0 %v1085
          %1109 = vmatprep.subr.bf16.mxu0 0
          %1110 = vmatpush1.bf16.msra.mxu0 %v1086
          %1111 = vmatprep.subr.bf16.mxu0 0
          %1112 = vmatpush1.bf16.msra.mxu0 0
          %1113 = vmatprep.subr.bf16.mxu0 0
          %1114 = vmatpush1.bf16.msra.mxu0 0
          %1115 = vmatprep.subr.bf16.mxu0 0
          %1116 = vmatpush1.bf16.msra.mxu0 0
          %1117 = vmatprep.subr.bf16.mxu0 0
          %1118 = vmatpush1.bf16.msra.mxu0 0
          %1119 = vmatprep.subr.bf16.mxu0 0
          %1120 = vmatpush1.bf16.msra.mxu0 0
          %1121 = vmatprep.subr.bf16.mxu0 0
          %1122 = vmatpush1.bf16.msra.mxu0 0
          %1123 = vmatprep.subr.bf16.mxu0 0
          %1124 = vmatpush1.bf16.msra.mxu0 0
          %1125 = vmatprep.subr.bf16.mxu0 0
          %1126 = vmatpush1.bf16.msra.mxu0 0
          %1127 = vmatprep.mubr.bf16.mxu0 0
          %1128 = vmatmul.mubr.bf16.gmra.mrb[0].mxu0 %v1020
          %v1129 = vpop.f32.mrb[0].mxu0
          %v1130 = vadd.f32 %v1046, %v1129
          %v1131 = vpop.f32.mrb[0].mxu0
          %v1132 = vpop.f32.mrb[0].mxu0
          %v1133 = vpop.f32.mrb[0].mxu0
          %1134 = vdwg.mxu0
          %1135 = vst [vmem:[%s7] sm:$0xff] %v1130
        $region68: #{decoder_forward.1} parent=47 // pred_fallthru
          _
        %p1136 = scmp.lt.s32.totalorder %s24, 1
        %s1137 = scalar_select %p1136, %s24, 1
        %s1138 = smul.addr %s1137, 8
        %s1139 = scalar_lea.vmem %s8, %s1138
        // Predicated region
        $region69: #{decoder_forward.1} parent=47 // pred_check
          %p1140 = pneg %p199
        $region70: #{decoder_forward.1} parent=47 // pred_check_branch
          %1142 = sbr.rel (%p1140) target = $region72
        $region71: #{decoder_forward.1} parent=47 // pred_region
          _
        $region72: #{decoder_forward.1} parent=47 // pred_fallthru
          _
        // Predicated region
        $region73: #{decoder_forward.1} parent=47 // pred_check
          %p1143 = pneg %p225
        $region74: #{decoder_forward.1} parent=47 // pred_check_branch
          %1145 = sbr.rel (%p1143) target = $region76
        $region75: #{decoder_forward.1} parent=47 // pred_region
          _
        $region76: #{decoder_forward.1} parent=47 // pred_fallthru
          _
        // Predicated region
        $region77: #{decoder_forward.1} parent=47 // pred_check
          %p1146 = pneg %p199
        $region78: #{decoder_forward.1} parent=47 // pred_check_branch
          %1148 = sbr.rel (%p1146) target = $region80
        $region79: #{decoder_forward.1} parent=47 // pred_region
          _
        $region80: #{decoder_forward.1} parent=47 // pred_fallthru
          _
      $region48: #{decoder_forward.1} parent=5 // pred_fallthru
        _
      %p1149 = scmp.le.s32.totalorder 2, %s19
      // Predicated region
      $region81: #{decoder_forward.1} parent=5 // pred_check
        %p1150 = pneg %p1149
      $region82: #{decoder_forward.1} parent=5 // pred_check_branch
        %1152 = sbr.rel (%p1150) target = $region84
      $region83: #{decoder_forward.1} parent=5 // pred_region
        %s1153 = ssub.s32 %s19, 2
        // Predicated region
        $region85: #{decoder_forward.1} parent=83 // pred_check
          %p1154 = pneg %p231
        $region86: #{decoder_forward.1} parent=83 // pred_check_branch
          %1156 = sbr.rel (%p1154) target = $region88
        $region87: #{decoder_forward.1} parent=83 // pred_region
          %p1157 = scmp.lt.s32.totalorder %s25, 1
          %s1158 = scalar_select %p1157, %s25, 1
          %s1159 = smul.addr %s1158, 8
          %s1160 = scalar_lea.vmem %s8, %s1159
        $region88: #{decoder_forward.1} parent=83 // pred_fallthru
          _
      $region84: #{decoder_forward.1} parent=5 // pred_fallthru
        _
    $region6: #{decoder_forward.1} parent=1 // loop_footer
      %s23 = sadd.s32 1, %s19
    $region7: #{decoder_forward.1} parent=1 // loop_footer_branch
      %18 = sbr.rel target = $region3
    $region8: #{decoder_forward.1} parent=1 // loop_exit
      _
    %1161 = vsyncpa [#allocation4], 1
    %s1162 = scalar_lea.sflag [#allocation4], 1
    %1163 = vsyncpa %s1162, 1
    %1164 = vsyncpa [#allocation6], 1
    %s1165 = scalar_lea.sflag [#allocation6], 1
    %1166 = vsyncpa %s1165, 1

</llo_original>
